<compile_context>
chip_gen: v5e
topology: v5e:2x2
jax: 0.10.0
libtpu: 0.0.40
codegen_flags: <defaults>
</compile_context>

<pallas_src>
import jax
import jax.numpy as jnp
from jax import lax
from jax.experimental import pallas as pl
from jax.experimental.pallas import tpu as pltpu


BINS = 10                # GHMC(bins=10)
MOMENTUM = 0.0           # default GHMC(momentum=0)
LOSS_WEIGHT = 1.0
LANES = 128
CHUNK = 8                # rows per inner-loop step: one f32 vreg per stream
DEFAULT_BLOCK_ROWS = 4096


def _chunk_bin_stats(p, t, w, row_ids, num_rows):
    """Per-bin contributions for one (crows, LANES) chunk.

    Returns (cnt_list, bsum_list): BINS arrays of shape (crows, LANES) each,
    where cnt is the 0/1 bin-membership indicator and bsum the bin-masked BCE.
    Pure VALU/EUP work — no cross-lane / cross-sublane reductions.
    """
    p = p.astype(jnp.float32)
    t = t.astype(jnp.float32)
    w = w.astype(jnp.float32)

    # One transcendental shared between sigmoid and BCE: e = exp(-|x|).
    e = jnp.exp(-jnp.abs(p))
    denom = 1.0 + e
    # EUP approximate reciprocal + one Newton step (~1e-8 rel error) instead of
    # an exact multi-op VALU divide (VALU is the saturating unit here).
    inv = pl.reciprocal(denom, approx=True)
    inv = inv * (2.0 - denom * inv)
    sig = jnp.where(p >= 0.0, inv, e * inv)          # numerically stable sigmoid
    g = jnp.abs(sig - t)

    # Stable binary_cross_entropy_with_logits: max(x,0) - x*z + log(1+exp(-|x|))
    bce = jnp.maximum(p, 0.0) - p * t + jnp.log1p(e)

    valid = w > 0.0
    if row_ids is not None:
        valid = jnp.logical_and(valid, row_ids < num_rows)

    # bin = clamp(floor(g*BINS), ., BINS-1) matches edges = arange(BINS+1)/BINS
    # with edges[-1] += 1e-6 (g <= 1 lands in the last bin).  Invalid -> -1.
    bin_idx = jnp.minimum(jnp.floor(g * jnp.float32(BINS)), jnp.float32(BINS - 1))
    bin_idx = jnp.where(valid, bin_idx, jnp.float32(-1.0))
    bce = jnp.where(valid, bce, 0.0)   # select: garbage/NaN rows cannot leak

    cnts, bsums = [], []
    for b in range(BINS):
        m = bin_idx == jnp.float32(b)                 # one compare per bin
        cnts.append(m.astype(jnp.float32))
        bsums.append(jnp.where(m, bce, 0.0))
    return cnts, bsums


def _make_ghmc_kernel(num_rows, need_row_mask):
    """num_rows: true row count of the (rows, 128) input.  need_row_mask: the
    last grid tile overruns num_rows and must be masked in-kernel."""

    def kernel(pred_ref, target_ref, lw_ref, cnt_ref, bsum_ref):
        block_rows = pred_ref.shape[0]          # static
        n_full = block_rows // CHUNK            # full CHUNK-row slabs
        rem = block_rows % CHUNK                # trailing slab (tiny inputs only)
        tile_row0 = pl.program_id(0) * block_rows

        base_ids = None
        if need_row_mask:
            base_ids = (lax.broadcasted_iota(jnp.int32, (CHUNK, LANES), 0)
                        + tile_row0)

        if n_full > 0:
            def body(c, carry):
                cnt_acc, bsum_acc = carry
                r0 = pl.multiple_of(c * CHUNK, CHUNK)
                p = pred_ref[pl.ds(r0, CHUNK), :]
                t = target_ref[pl.ds(r0, CHUNK), :]
                w = lw_ref[pl.ds(r0, CHUNK), :]
                row_ids = None if base_ids is None else base_ids + r0
                cnts, bsums = _chunk_bin_stats(p, t, w, row_ids, num_rows)
                cnt_acc = tuple(a + c_ for a, c_ in zip(cnt_acc, cnts))
                bsum_acc = tuple(a + s for a, s in zip(bsum_acc, bsums))
                return cnt_acc, bsum_acc

            zeros = tuple(jnp.zeros((CHUNK, LANES), jnp.float32)
                          for _ in range(BINS))
            cnt_acc, bsum_acc = lax.fori_loop(0, n_full, body, (zeros, zeros))
            # Single cross-sublane reduction per bin, once per tile.
            cnt_rows = [jnp.sum(a, axis=0, keepdims=True) for a in cnt_acc]
            bsum_rows = [jnp.sum(a, axis=0, keepdims=True) for a in bsum_acc]
        else:
            cnt_rows = [jnp.zeros((1, LANES), jnp.float32) for _ in range(BINS)]
            bsum_rows = [jnp.zeros((1, LANES), jnp.float32) for _ in range(BINS)]

        if rem > 0:
            r0 = n_full * CHUNK                 # static
            p = pred_ref[r0:r0 + rem, :]
            t = target_ref[r0:r0 + rem, :]
            w = lw_ref[r0:r0 + rem, :]
            row_ids = None
            if need_row_mask:
                row_ids = (lax.broadcasted_iota(jnp.int32, (rem, LANES), 0)
                           + (tile_row0 + r0))
            cnts, bsums = _chunk_bin_stats(p, t, w, row_ids, num_rows)
            cnt_rows = [a + jnp.sum(c_, axis=0, keepdims=True)
                        for a, c_ in zip(cnt_rows, cnts)]
            bsum_rows = [a + jnp.sum(s, axis=0, keepdims=True)
                         for a, s in zip(bsum_rows, bsums)]

        # One single-row store per bin per output, once per tile.
        for b in range(BINS):
            cnt_ref[pl.ds(b, 1), :] = cnt_rows[b]
            bsum_ref[pl.ds(b, 1), :] = bsum_rows[b]

    return kernel


def ghmc_loss(pred, target, label_weight, *, block_rows=DEFAULT_BLOCK_ROWS):
    """GHM-C loss (bins=10, momentum=0, use_sigmoid=True). Returns a scalar."""
    assert pred.shape == target.shape == label_weight.shape
    # TODO(synk): the _expand_binary_labels path (integer class labels ->
    # one-hot scatter when pred.dim() != target.dim()) is a data-dependent
    # scatter and is not implemented; inputs must be same-shape binary targets.
    # TODO(synk): momentum > 0 (persistent acc_sum EMA across calls) is not
    # implemented; this covers the default momentum == 0 configuration.

    total = int(pred.size)
    p = pred.reshape(-1)
    t = target.reshape(-1)
    w = label_weight.reshape(-1)

    if total % LANES != 0:
        # TODO(synk): only the lane tail needs padding, but this still copies
        # the arrays once; 128-divisible inputs take the pad-free path.
        padded = pl.cdiv(total, LANES) * LANES
        pad = padded - total
        p = jnp.pad(p, (0, pad))
        t = jnp.pad(t, (0, pad))
        w = jnp.pad(w, (0, pad))   # weight 0 => invalid, excluded everywhere
        total = padded

    rows = total // LANES
    p2 = p.reshape(rows, LANES)    # contiguous reshape: free, no HBM copy
    t2 = t.reshape(rows, LANES)
    w2 = w.reshape(rows, LANES)

    # Row-tile size: multiple of 8 (sublane) when tiling; full extent for tiny
    # inputs.  Prefer >= 2 tiles so a v7x megacore can shard the "parallel"
    # axis across both TensorCores.
    if rows <= 8:
        br = rows
    else:
        br = max(8, min((int(block_rows) // 8) * 8, (rows // 8) * 8))
        while -(-rows // br) < 2 and br > 8:
            br = max(8, ((br // 2) // 8) * 8)
    num_tiles = -(-rows // br)
    need_row_mask = (rows % br) != 0   # ragged last tile -> mask in kernel

    in_spec = pl.BlockSpec((br, LANES), lambda i: (i, 0))
    out_spec = pl.BlockSpec((None, BINS, LANES), lambda i: (i, 0, 0))
    part_shape = jax.ShapeDtypeStruct((num_tiles, BINS, LANES), jnp.float32)

    cnt, bsum = pl.pallas_call(
        _make_ghmc_kernel(rows, need_row_mask),
        out_shape=(part_shape, part_shape),
        grid=(num_tiles,),
        in_specs=[in_spec, in_spec, in_spec],
        out_specs=(out_spec, out_spec),
        compiler_params=pltpu.CompilerParams(
            dimension_semantics=("parallel",),
            vmem_limit_bytes=32 * 1024 * 1024),
    )(p2, t2, w2)

    # Tiny finish: (tiles, BINS, 128) -> per-bin scalars, then GHM weighting.
    # Per-tile/lane counts are small exact integers; sum them in int32 so the
    # totals stay exact even for very large inputs.
    cnt_b = jnp.sum(cnt.astype(jnp.int32), axis=(0, 2)).astype(jnp.float32)
    bsum_b = jnp.sum(bsum, axis=(0, 2))
    nonempty = cnt_b > 0.0
    n = jnp.sum(nonempty.astype(jnp.float32))
    # loss = sum(bce*wgt)/tot with wgt = tot/count_b/n == (1/n) * sum_b bsum_b/cnt_b
    per_bin = jnp.where(nonempty, bsum_b / jnp.maximum(cnt_b, 1.0), 0.0)
    loss = jnp.where(n > 0.0, jnp.sum(per_bin) / jnp.maximum(n, 1.0), 0.0)
    return loss * jnp.float32(LOSS_WEIGHT)


def _ghmc_reference(pred, target, label_weight):
    """Pure-JAX mirror of the PyTorch GHMC.forward (momentum=0)."""
    pred = pred.astype(jnp.float32)
    target = target.astype(jnp.float32)
    lw = label_weight.astype(jnp.float32)

    g = jnp.abs(jax.nn.sigmoid(pred) - target)
    valid = lw > 0
    tot = jnp.maximum(jnp.sum(valid.astype(jnp.float32)), 1.0)
    edges = jnp.arange(BINS + 1, dtype=jnp.float32) / BINS
    edges = edges.at[-1].add(1e-6)

    weights = jnp.zeros_like(pred)
    n = jnp.float32(0.0)
    for i in range(BINS):
        inds = (g >= edges[i]) & (g < edges[i + 1]) & valid
        num = jnp.sum(inds.astype(jnp.float32))
        has = num > 0
        wv = jnp.where(has, tot / jnp.maximum(num, 1.0), 0.0)
        weights = weights + inds.astype(jnp.float32) * wv
        n = n + has.astype(jnp.float32)
    weights = jnp.where(n > 0, weights / jnp.maximum(n, 1.0), weights)

    bce = (jnp.maximum(pred, 0.0) - pred * target
           + jnp.log1p(jnp.exp(-jnp.abs(pred))))
    return jnp.sum(bce * weights) / tot * LOSS_WEIGHT


if __name__ == "__main__":
    key = jax.random.PRNGKey(0)
    k1, k2, k3, k4, k5, k6 = jax.random.split(key, 6)

    # Case 1: [batch_num, class_num] = [16, 32].  total % 128 == 0 -> pad-free
    # path, single full-extent tile, remainder-chunk path inside the kernel.
    pred1 = jax.random.normal(k1, (16, 32), dtype=jnp.float32) * 2.0
    target1 = (jax.random.uniform(k2, (16, 32)) > 0.7).astype(jnp.float32)
    lw1 = (jax.random.uniform(k3, (16, 32)) > 0.2).astype(jnp.float32)

    out1 = ghmc_loss(pred1, target1, lw1)
    jax.block_until_ready(out1)
    ref1 = _ghmc_reference(pred1, target1, lw1)
    assert jnp.allclose(out1, ref1, rtol=1e-4, atol=1e-6), (out1, ref1)

    # Case 2: [63, 100].  total % 128 != 0 -> lane-tail pad; multi-tile grid
    # with a ragged last tile exercising the in-kernel row mask + fori_loop.
    pred2 = jax.random.normal(k4, (63, 100), dtype=jnp.float32) * 2.0
    target2 = (jax.random.uniform(k5, (63, 100)) > 0.6).astype(jnp.float32)
    lw2 = (jax.random.uniform(k6, (63, 100)) > 0.1).astype(jnp.float32)

    out2 = ghmc_loss(pred2, target2, lw2)
    jax.block_until_ready(out2)
    ref2 = _ghmc_reference(pred2, target2, lw2)
    assert jnp.allclose(out2, ref2, rtol=1e-4, atol=1e-6), (out2, ref2)

    print("KERNEL_OK")
</pallas_src>

<mosaic_0001>
module attributes {stable_mosaic.version = 11 : i64} {
  func.func @kernel(%arg0: i32, %arg1: memref<4x128xf32, #tpu.memory_space<vmem>>, %arg2: memref<4x128xf32, #tpu.memory_space<vmem>>, %arg3: memref<4x128xf32, #tpu.memory_space<vmem>>, %arg4: memref<1x10x128xf32, #tpu.memory_space<vmem>>, %arg5: memref<1x10x128xf32, #tpu.memory_space<vmem>>) attributes {dimension_semantics = [#tpu.dimension_semantics<parallel>], iteration_bounds = array<i64: 1>, scalar_prefetch = 0 : i64, scratch_operands = 0 : i64, tpu.core_type = #tpu.core_type<tc>, window_params = [{transform_indices = @transform_0, window_bounds = array<i64: 4, 128>}, {transform_indices = @transform_1, window_bounds = array<i64: 4, 128>}, {transform_indices = @transform_2, window_bounds = array<i64: 4, 128>}, {transform_indices = @transform_3, window_bounds = array<i64: 1, 10, 128>}, {transform_indices = @transform_4, window_bounds = array<i64: 1, 10, 128>}]} {
    %cst = arith.constant 0.000000e+00 : f32
    %0 = vector.broadcast %cst : f32 to vector<1x128xf32>
    %cst_0 = arith.constant 0.000000e+00 : f32
    %1 = vector.broadcast %cst_0 : f32 to vector<1x128xf32>
    %cst_1 = arith.constant 0.000000e+00 : f32
    %2 = vector.broadcast %cst_1 : f32 to vector<1x128xf32>
    %cst_2 = arith.constant 0.000000e+00 : f32
    %3 = vector.broadcast %cst_2 : f32 to vector<1x128xf32>
    %cst_3 = arith.constant 0.000000e+00 : f32
    %4 = vector.broadcast %cst_3 : f32 to vector<1x128xf32>
    %cst_4 = arith.constant 0.000000e+00 : f32
    %5 = vector.broadcast %cst_4 : f32 to vector<1x128xf32>
    %cst_5 = arith.constant 0.000000e+00 : f32
    %6 = vector.broadcast %cst_5 : f32 to vector<1x128xf32>
    %cst_6 = arith.constant 0.000000e+00 : f32
    %7 = vector.broadcast %cst_6 : f32 to vector<1x128xf32>
    %cst_7 = arith.constant 0.000000e+00 : f32
    %8 = vector.broadcast %cst_7 : f32 to vector<1x128xf32>
    %cst_8 = arith.constant 0.000000e+00 : f32
    %9 = vector.broadcast %cst_8 : f32 to vector<1x128xf32>
    %cst_9 = arith.constant 0.000000e+00 : f32
    %10 = vector.broadcast %cst_9 : f32 to vector<1x128xf32>
    %cst_10 = arith.constant 0.000000e+00 : f32
    %11 = vector.broadcast %cst_10 : f32 to vector<1x128xf32>
    %cst_11 = arith.constant 0.000000e+00 : f32
    %12 = vector.broadcast %cst_11 : f32 to vector<1x128xf32>
    %cst_12 = arith.constant 0.000000e+00 : f32
    %13 = vector.broadcast %cst_12 : f32 to vector<1x128xf32>
    %cst_13 = arith.constant 0.000000e+00 : f32
    %14 = vector.broadcast %cst_13 : f32 to vector<1x128xf32>
    %cst_14 = arith.constant 0.000000e+00 : f32
    %15 = vector.broadcast %cst_14 : f32 to vector<1x128xf32>
    %cst_15 = arith.constant 0.000000e+00 : f32
    %16 = vector.broadcast %cst_15 : f32 to vector<1x128xf32>
    %cst_16 = arith.constant 0.000000e+00 : f32
    %17 = vector.broadcast %cst_16 : f32 to vector<1x128xf32>
    %cst_17 = arith.constant 0.000000e+00 : f32
    %18 = vector.broadcast %cst_17 : f32 to vector<1x128xf32>
    %cst_18 = arith.constant 0.000000e+00 : f32
    %19 = vector.broadcast %cst_18 : f32 to vector<1x128xf32>
    %c0 = arith.constant 0 : index
    %c0_19 = arith.constant 0 : index
    %20 = vector.load %arg1[%c0, %c0_19] : memref<4x128xf32, #tpu.memory_space<vmem>>, vector<4x128xf32>
    %c0_20 = arith.constant 0 : index
    %c0_21 = arith.constant 0 : index
    %21 = vector.load %arg2[%c0_20, %c0_21] : memref<4x128xf32, #tpu.memory_space<vmem>>, vector<4x128xf32>
    %c0_22 = arith.constant 0 : index
    %c0_23 = arith.constant 0 : index
    %22 = vector.load %arg3[%c0_22, %c0_23] : memref<4x128xf32, #tpu.memory_space<vmem>>, vector<4x128xf32>
    %23 = math.absf %20 : vector<4x128xf32>
    %cst_24 = arith.constant 0.000000e+00 : f32
    %24 = vector.broadcast %cst_24 : f32 to vector<4x128xf32>
    %25 = arith.subf %24, %23 : vector<4x128xf32>
    %26 = math.exp %25 : vector<4x128xf32>
    %cst_25 = arith.constant 1.000000e+00 : f32
    %27 = vector.broadcast %cst_25 : f32 to vector<4x128xf32>
    %28 = arith.addf %27, %26 : vector<4x128xf32>
    %29 = tpu.reciprocal %28 {approx = true} : vector<4x128xf32> -> vector<4x128xf32>
    %30 = arith.mulf %28, %29 : vector<4x128xf32>
    %cst_26 = arith.constant 2.000000e+00 : f32
    %31 = vector.broadcast %cst_26 : f32 to vector<4x128xf32>
    %32 = arith.subf %31, %30 : vector<4x128xf32>
    %33 = arith.mulf %29, %32 : vector<4x128xf32>
    %cst_27 = arith.constant 0.000000e+00 : f32
    %34 = vector.broadcast %cst_27 : f32 to vector<4x128xf32>
    %35 = arith.cmpf oge, %20, %34 : vector<4x128xf32>
    %36 = arith.mulf %26, %33 : vector<4x128xf32>
    %37 = arith.select %35, %33, %36 : vector<4x128xi1>, vector<4x128xf32>
    %38 = arith.subf %37, %21 : vector<4x128xf32>
    %39 = math.absf %38 : vector<4x128xf32>
    %cst_28 = arith.constant 0.000000e+00 : f32
    %40 = vector.broadcast %cst_28 : f32 to vector<4x128xf32>
    %41 = arith.maximumf %20, %40 : vector<4x128xf32>
    %42 = arith.mulf %20, %21 : vector<4x128xf32>
    %43 = arith.subf %41, %42 : vector<4x128xf32>
    %44 = math.log1p %26 : vector<4x128xf32>
    %45 = arith.addf %43, %44 : vector<4x128xf32>
    %cst_29 = arith.constant 0.000000e+00 : f32
    %46 = vector.broadcast %cst_29 : f32 to vector<4x128xf32>
    %47 = arith.cmpf ogt, %22, %46 : vector<4x128xf32>
    %cst_30 = arith.constant 1.000000e+01 : f32
    %48 = vector.broadcast %cst_30 : f32 to vector<4x128xf32>
    %49 = arith.mulf %39, %48 : vector<4x128xf32>
    %50 = math.floor %49 : vector<4x128xf32>
    %cst_31 = arith.constant 9.000000e+00 : f32
    %51 = vector.broadcast %cst_31 : f32 to vector<4x128xf32>
    %52 = arith.minimumf %50, %51 : vector<4x128xf32>
    %cst_32 = arith.constant -1.000000e+00 : f32
    %53 = vector.broadcast %cst_32 : f32 to vector<4x128xf32>
    %54 = arith.select %47, %52, %53 : vector<4x128xi1>, vector<4x128xf32>
    %cst_33 = arith.constant 0.000000e+00 : f32
    %55 = vector.broadcast %cst_33 : f32 to vector<4x128xf32>
    %56 = arith.select %47, %45, %55 : vector<4x128xi1>, vector<4x128xf32>
    %cst_34 = arith.constant 0.000000e+00 : f32
    %57 = vector.broadcast %cst_34 : f32 to vector<4x128xf32>
    %58 = arith.cmpf oeq, %54, %57 : vector<4x128xf32>
    %59 = arith.extui %58 : vector<4x128xi1> to vector<4x128xi32>
    %60 = arith.sitofp %59 : vector<4x128xi32> to vector<4x128xf32>
    %cst_35 = arith.constant 0.000000e+00 : f32
    %61 = vector.broadcast %cst_35 : f32 to vector<4x128xf32>
    %62 = arith.select %58, %56, %61 : vector<4x128xi1>, vector<4x128xf32>
    %cst_36 = arith.constant 1.000000e+00 : f32
    %63 = vector.broadcast %cst_36 : f32 to vector<4x128xf32>
    %64 = arith.cmpf oeq, %54, %63 : vector<4x128xf32>
    %65 = arith.extui %64 : vector<4x128xi1> to vector<4x128xi32>
    %66 = arith.sitofp %65 : vector<4x128xi32> to vector<4x128xf32>
    %cst_37 = arith.constant 0.000000e+00 : f32
    %67 = vector.broadcast %cst_37 : f32 to vector<4x128xf32>
    %68 = arith.select %64, %56, %67 : vector<4x128xi1>, vector<4x128xf32>
    %cst_38 = arith.constant 2.000000e+00 : f32
    %69 = vector.broadcast %cst_38 : f32 to vector<4x128xf32>
    %70 = arith.cmpf oeq, %54, %69 : vector<4x128xf32>
    %71 = arith.extui %70 : vector<4x128xi1> to vector<4x128xi32>
    %72 = arith.sitofp %71 : vector<4x128xi32> to vector<4x128xf32>
    %cst_39 = arith.constant 0.000000e+00 : f32
    %73 = vector.broadcast %cst_39 : f32 to vector<4x128xf32>
    %74 = arith.select %70, %56, %73 : vector<4x128xi1>, vector<4x128xf32>
    %cst_40 = arith.constant 3.000000e+00 : f32
    %75 = vector.broadcast %cst_40 : f32 to vector<4x128xf32>
    %76 = arith.cmpf oeq, %54, %75 : vector<4x128xf32>
    %77 = arith.extui %76 : vector<4x128xi1> to vector<4x128xi32>
    %78 = arith.sitofp %77 : vector<4x128xi32> to vector<4x128xf32>
    %cst_41 = arith.constant 0.000000e+00 : f32
    %79 = vector.broadcast %cst_41 : f32 to vector<4x128xf32>
    %80 = arith.select %76, %56, %79 : vector<4x128xi1>, vector<4x128xf32>
    %cst_42 = arith.constant 4.000000e+00 : f32
    %81 = vector.broadcast %cst_42 : f32 to vector<4x128xf32>
    %82 = arith.cmpf oeq, %54, %81 : vector<4x128xf32>
    %83 = arith.extui %82 : vector<4x128xi1> to vector<4x128xi32>
    %84 = arith.sitofp %83 : vector<4x128xi32> to vector<4x128xf32>
    %cst_43 = arith.constant 0.000000e+00 : f32
    %85 = vector.broadcast %cst_43 : f32 to vector<4x128xf32>
    %86 = arith.select %82, %56, %85 : vector<4x128xi1>, vector<4x128xf32>
    %cst_44 = arith.constant 5.000000e+00 : f32
    %87 = vector.broadcast %cst_44 : f32 to vector<4x128xf32>
    %88 = arith.cmpf oeq, %54, %87 : vector<4x128xf32>
    %89 = arith.extui %88 : vector<4x128xi1> to vector<4x128xi32>
    %90 = arith.sitofp %89 : vector<4x128xi32> to vector<4x128xf32>
    %cst_45 = arith.constant 0.000000e+00 : f32
    %91 = vector.broadcast %cst_45 : f32 to vector<4x128xf32>
    %92 = arith.select %88, %56, %91 : vector<4x128xi1>, vector<4x128xf32>
    %cst_46 = arith.constant 6.000000e+00 : f32
    %93 = vector.broadcast %cst_46 : f32 to vector<4x128xf32>
    %94 = arith.cmpf oeq, %54, %93 : vector<4x128xf32>
    %95 = arith.extui %94 : vector<4x128xi1> to vector<4x128xi32>
    %96 = arith.sitofp %95 : vector<4x128xi32> to vector<4x128xf32>
    %cst_47 = arith.constant 0.000000e+00 : f32
    %97 = vector.broadcast %cst_47 : f32 to vector<4x128xf32>
    %98 = arith.select %94, %56, %97 : vector<4x128xi1>, vector<4x128xf32>
    %cst_48 = arith.constant 7.000000e+00 : f32
    %99 = vector.broadcast %cst_48 : f32 to vector<4x128xf32>
    %100 = arith.cmpf oeq, %54, %99 : vector<4x128xf32>
    %101 = arith.extui %100 : vector<4x128xi1> to vector<4x128xi32>
    %102 = arith.sitofp %101 : vector<4x128xi32> to vector<4x128xf32>
    %cst_49 = arith.constant 0.000000e+00 : f32
    %103 = vector.broadcast %cst_49 : f32 to vector<4x128xf32>
    %104 = arith.select %100, %56, %103 : vector<4x128xi1>, vector<4x128xf32>
    %cst_50 = arith.constant 8.000000e+00 : f32
    %105 = vector.broadcast %cst_50 : f32 to vector<4x128xf32>
    %106 = arith.cmpf oeq, %54, %105 : vector<4x128xf32>
    %107 = arith.extui %106 : vector<4x128xi1> to vector<4x128xi32>
    %108 = arith.sitofp %107 : vector<4x128xi32> to vector<4x128xf32>
    %cst_51 = arith.constant 0.000000e+00 : f32
    %109 = vector.broadcast %cst_51 : f32 to vector<4x128xf32>
    %110 = arith.select %106, %56, %109 : vector<4x128xi1>, vector<4x128xf32>
    %cst_52 = arith.constant 9.000000e+00 : f32
    %111 = vector.broadcast %cst_52 : f32 to vector<4x128xf32>
    %112 = arith.cmpf oeq, %54, %111 : vector<4x128xf32>
    %113 = arith.extui %112 : vector<4x128xi1> to vector<4x128xi32>
    %114 = arith.sitofp %113 : vector<4x128xi32> to vector<4x128xf32>
    %cst_53 = arith.constant 0.000000e+00 : f32
    %115 = vector.broadcast %cst_53 : f32 to vector<4x128xf32>
    %116 = arith.select %112, %56, %115 : vector<4x128xi1>, vector<4x128xf32>
    %cst_54 = arith.constant dense<0.000000e+00> : vector<128xf32>
    %117 = vector.multi_reduction <add>, %60, %cst_54 [0] : vector<4x128xf32> to vector<128xf32>
    %118 = vector.shape_cast %117 : vector<128xf32> to vector<1x128xf32>
    %119 = arith.addf %0, %118 : vector<1x128xf32>
    %cst_55 = arith.constant dense<0.000000e+00> : vector<128xf32>
    %120 = vector.multi_reduction <add>, %66, %cst_55 [0] : vector<4x128xf32> to vector<128xf32>
    %121 = vector.shape_cast %120 : vector<128xf32> to vector<1x128xf32>
    %122 = arith.addf %1, %121 : vector<1x128xf32>
    %cst_56 = arith.constant dense<0.000000e+00> : vector<128xf32>
    %123 = vector.multi_reduction <add>, %72, %cst_56 [0] : vector<4x128xf32> to vector<128xf32>
    %124 = vector.shape_cast %123 : vector<128xf32> to vector<1x128xf32>
    %125 = arith.addf %2, %124 : vector<1x128xf32>
    %cst_57 = arith.constant dense<0.000000e+00> : vector<128xf32>
    %126 = vector.multi_reduction <add>, %78, %cst_57 [0] : vector<4x128xf32> to vector<128xf32>
    %127 = vector.shape_cast %126 : vector<128xf32> to vector<1x128xf32>
    %128 = arith.addf %3, %127 : vector<1x128xf32>
    %cst_58 = arith.constant dense<0.000000e+00> : vector<128xf32>
    %129 = vector.multi_reduction <add>, %84, %cst_58 [0] : vector<4x128xf32> to vector<128xf32>
    %130 = vector.shape_cast %129 : vector<128xf32> to vector<1x128xf32>
    %131 = arith.addf %4, %130 : vector<1x128xf32>
    %cst_59 = arith.constant dense<0.000000e+00> : vector<128xf32>
    %132 = vector.multi_reduction <add>, %90, %cst_59 [0] : vector<4x128xf32> to vector<128xf32>
    %133 = vector.shape_cast %132 : vector<128xf32> to vector<1x128xf32>
    %134 = arith.addf %5, %133 : vector<1x128xf32>
    %cst_60 = arith.constant dense<0.000000e+00> : vector<128xf32>
    %135 = vector.multi_reduction <add>, %96, %cst_60 [0] : vector<4x128xf32> to vector<128xf32>
    %136 = vector.shape_cast %135 : vector<128xf32> to vector<1x128xf32>
    %137 = arith.addf %6, %136 : vector<1x128xf32>
    %cst_61 = arith.constant dense<0.000000e+00> : vector<128xf32>
    %138 = vector.multi_reduction <add>, %102, %cst_61 [0] : vector<4x128xf32> to vector<128xf32>
    %139 = vector.shape_cast %138 : vector<128xf32> to vector<1x128xf32>
    %140 = arith.addf %7, %139 : vector<1x128xf32>
    %cst_62 = arith.constant dense<0.000000e+00> : vector<128xf32>
    %141 = vector.multi_reduction <add>, %108, %cst_62 [0] : vector<4x128xf32> to vector<128xf32>
    %142 = vector.shape_cast %141 : vector<128xf32> to vector<1x128xf32>
    %143 = arith.addf %8, %142 : vector<1x128xf32>
    %cst_63 = arith.constant dense<0.000000e+00> : vector<128xf32>
    %144 = vector.multi_reduction <add>, %114, %cst_63 [0] : vector<4x128xf32> to vector<128xf32>
    %145 = vector.shape_cast %144 : vector<128xf32> to vector<1x128xf32>
    %146 = arith.addf %9, %145 : vector<1x128xf32>
    %cst_64 = arith.constant dense<0.000000e+00> : vector<128xf32>
    %147 = vector.multi_reduction <add>, %62, %cst_64 [0] : vector<4x128xf32> to vector<128xf32>
    %148 = vector.shape_cast %147 : vector<128xf32> to vector<1x128xf32>
    %149 = arith.addf %10, %148 : vector<1x128xf32>
    %cst_65 = arith.constant dense<0.000000e+00> : vector<128xf32>
    %150 = vector.multi_reduction <add>, %68, %cst_65 [0] : vector<4x128xf32> to vector<128xf32>
    %151 = vector.shape_cast %150 : vector<128xf32> to vector<1x128xf32>
    %152 = arith.addf %11, %151 : vector<1x128xf32>
    %cst_66 = arith.constant dense<0.000000e+00> : vector<128xf32>
    %153 = vector.multi_reduction <add>, %74, %cst_66 [0] : vector<4x128xf32> to vector<128xf32>
    %154 = vector.shape_cast %153 : vector<128xf32> to vector<1x128xf32>
    %155 = arith.addf %12, %154 : vector<1x128xf32>
    %cst_67 = arith.constant dense<0.000000e+00> : vector<128xf32>
    %156 = vector.multi_reduction <add>, %80, %cst_67 [0] : vector<4x128xf32> to vector<128xf32>
    %157 = vector.shape_cast %156 : vector<128xf32> to vector<1x128xf32>
    %158 = arith.addf %13, %157 : vector<1x128xf32>
    %cst_68 = arith.constant dense<0.000000e+00> : vector<128xf32>
    %159 = vector.multi_reduction <add>, %86, %cst_68 [0] : vector<4x128xf32> to vector<128xf32>
    %160 = vector.shape_cast %159 : vector<128xf32> to vector<1x128xf32>
    %161 = arith.addf %14, %160 : vector<1x128xf32>
    %cst_69 = arith.constant dense<0.000000e+00> : vector<128xf32>
    %162 = vector.multi_reduction <add>, %92, %cst_69 [0] : vector<4x128xf32> to vector<128xf32>
    %163 = vector.shape_cast %162 : vector<128xf32> to vector<1x128xf32>
    %164 = arith.addf %15, %163 : vector<1x128xf32>
    %cst_70 = arith.constant dense<0.000000e+00> : vector<128xf32>
    %165 = vector.multi_reduction <add>, %98, %cst_70 [0] : vector<4x128xf32> to vector<128xf32>
    %166 = vector.shape_cast %165 : vector<128xf32> to vector<1x128xf32>
    %167 = arith.addf %16, %166 : vector<1x128xf32>
    %cst_71 = arith.constant dense<0.000000e+00> : vector<128xf32>
    %168 = vector.multi_reduction <add>, %104, %cst_71 [0] : vector<4x128xf32> to vector<128xf32>
    %169 = vector.shape_cast %168 : vector<128xf32> to vector<1x128xf32>
    %170 = arith.addf %17, %169 : vector<1x128xf32>
    %cst_72 = arith.constant dense<0.000000e+00> : vector<128xf32>
    %171 = vector.multi_reduction <add>, %110, %cst_72 [0] : vector<4x128xf32> to vector<128xf32>
    %172 = vector.shape_cast %171 : vector<128xf32> to vector<1x128xf32>
    %173 = arith.addf %18, %172 : vector<1x128xf32>
    %cst_73 = arith.constant dense<0.000000e+00> : vector<128xf32>
    %174 = vector.multi_reduction <add>, %116, %cst_73 [0] : vector<4x128xf32> to vector<128xf32>
    %175 = vector.shape_cast %174 : vector<128xf32> to vector<1x128xf32>
    %176 = arith.addf %19, %175 : vector<1x128xf32>
    %c0_74 = arith.constant 0 : index
    %c0_75 = arith.constant 0 : index
    %c0_76 = arith.constant 0 : index
    %177 = vector.load %arg4[%c0_74, %c0_75, %c0_76] : memref<1x10x128xf32, #tpu.memory_space<vmem>>, vector<1x1x128xf32>
    %178 = vector.shape_cast %177 : vector<1x1x128xf32> to vector<1x128xf32>
    %179 = vector.shape_cast %119 : vector<1x128xf32> to vector<1x1x128xf32>
    tpu.vector_store %arg4[%c0_74, %c0_75, %c0_76], %179 {strides = array<i32>} : memref<1x10x128xf32, #tpu.memory_space<vmem>>, vector<1x1x128xf32>,
    %c0_77 = arith.constant 0 : index
    %c0_78 = arith.constant 0 : index
    %c0_79 = arith.constant 0 : index
    %180 = vector.load %arg5[%c0_77, %c0_78, %c0_79] : memref<1x10x128xf32, #tpu.memory_space<vmem>>, vector<1x1x128xf32>
    %181 = vector.shape_cast %180 : vector<1x1x128xf32> to vector<1x128xf32>
    %182 = vector.shape_cast %149 : vector<1x128xf32> to vector<1x1x128xf32>
    tpu.vector_store %arg5[%c0_77, %c0_78, %c0_79], %182 {strides = array<i32>} : memref<1x10x128xf32, #tpu.memory_space<vmem>>, vector<1x1x128xf32>,
    %c0_80 = arith.constant 0 : index
    %c1 = arith.constant 1 : index
    %c0_81 = arith.constant 0 : index
    %183 = vector.load %arg4[%c0_80, %c1, %c0_81] : memref<1x10x128xf32, #tpu.memory_space<vmem>>, vector<1x1x128xf32>
    %184 = vector.shape_cast %183 : vector<1x1x128xf32> to vector<1x128xf32>
    %185 = vector.shape_cast %122 : vector<1x128xf32> to vector<1x1x128xf32>
    tpu.vector_store %arg4[%c0_80, %c1, %c0_81], %185 {strides = array<i32>} : memref<1x10x128xf32, #tpu.memory_space<vmem>>, vector<1x1x128xf32>,
    %c0_82 = arith.constant 0 : index
    %c1_83 = arith.constant 1 : index
    %c0_84 = arith.constant 0 : index
    %186 = vector.load %arg5[%c0_82, %c1_83, %c0_84] : memref<1x10x128xf32, #tpu.memory_space<vmem>>, vector<1x1x128xf32>
    %187 = vector.shape_cast %186 : vector<1x1x128xf32> to vector<1x128xf32>
    %188 = vector.shape_cast %152 : vector<1x128xf32> to vector<1x1x128xf32>
    tpu.vector_store %arg5[%c0_82, %c1_83, %c0_84], %188 {strides = array<i32>} : memref<1x10x128xf32, #tpu.memory_space<vmem>>, vector<1x1x128xf32>,
    %c0_85 = arith.constant 0 : index
    %c2 = arith.constant 2 : index
    %c0_86 = arith.constant 0 : index
    %189 = vector.load %arg4[%c0_85, %c2, %c0_86] : memref<1x10x128xf32, #tpu.memory_space<vmem>>, vector<1x1x128xf32>
    %190 = vector.shape_cast %189 : vector<1x1x128xf32> to vector<1x128xf32>
    %191 = vector.shape_cast %125 : vector<1x128xf32> to vector<1x1x128xf32>
    tpu.vector_store %arg4[%c0_85, %c2, %c0_86], %191 {strides = array<i32>} : memref<1x10x128xf32, #tpu.memory_space<vmem>>, vector<1x1x128xf32>,
    %c0_87 = arith.constant 0 : index
    %c2_88 = arith.constant 2 : index
    %c0_89 = arith.constant 0 : index
    %192 = vector.load %arg5[%c0_87, %c2_88, %c0_89] : memref<1x10x128xf32, #tpu.memory_space<vmem>>, vector<1x1x128xf32>
    %193 = vector.shape_cast %192 : vector<1x1x128xf32> to vector<1x128xf32>
    %194 = vector.shape_cast %155 : vector<1x128xf32> to vector<1x1x128xf32>
    tpu.vector_store %arg5[%c0_87, %c2_88, %c0_89], %194 {strides = array<i32>} : memref<1x10x128xf32, #tpu.memory_space<vmem>>, vector<1x1x128xf32>,
    %c0_90 = arith.constant 0 : index
    %c3 = arith.constant 3 : index
    %c0_91 = arith.constant 0 : index
    %195 = vector.load %arg4[%c0_90, %c3, %c0_91] : memref<1x10x128xf32, #tpu.memory_space<vmem>>, vector<1x1x128xf32>
    %196 = vector.shape_cast %195 : vector<1x1x128xf32> to vector<1x128xf32>
    %197 = vector.shape_cast %128 : vector<1x128xf32> to vector<1x1x128xf32>
    tpu.vector_store %arg4[%c0_90, %c3, %c0_91], %197 {strides = array<i32>} : memref<1x10x128xf32, #tpu.memory_space<vmem>>, vector<1x1x128xf32>,
    %c0_92 = arith.constant 0 : index
    %c3_93 = arith.constant 3 : index
    %c0_94 = arith.constant 0 : index
    %198 = vector.load %arg5[%c0_92, %c3_93, %c0_94] : memref<1x10x128xf32, #tpu.memory_space<vmem>>, vector<1x1x128xf32>
    %199 = vector.shape_cast %198 : vector<1x1x128xf32> to vector<1x128xf32>
    %200 = vector.shape_cast %158 : vector<1x128xf32> to vector<1x1x128xf32>
    tpu.vector_store %arg5[%c0_92, %c3_93, %c0_94], %200 {strides = array<i32>} : memref<1x10x128xf32, #tpu.memory_space<vmem>>, vector<1x1x128xf32>,
    %c0_95 = arith.constant 0 : index
    %c4 = arith.constant 4 : index
    %c0_96 = arith.constant 0 : index
    %201 = vector.load %arg4[%c0_95, %c4, %c0_96] : memref<1x10x128xf32, #tpu.memory_space<vmem>>, vector<1x1x128xf32>
    %202 = vector.shape_cast %201 : vector<1x1x128xf32> to vector<1x128xf32>
    %203 = vector.shape_cast %131 : vector<1x128xf32> to vector<1x1x128xf32>
    tpu.vector_store %arg4[%c0_95, %c4, %c0_96], %203 {strides = array<i32>} : memref<1x10x128xf32, #tpu.memory_space<vmem>>, vector<1x1x128xf32>,
    %c0_97 = arith.constant 0 : index
    %c4_98 = arith.constant 4 : index
    %c0_99 = arith.constant 0 : index
    %204 = vector.load %arg5[%c0_97, %c4_98, %c0_99] : memref<1x10x128xf32, #tpu.memory_space<vmem>>, vector<1x1x128xf32>
    %205 = vector.shape_cast %204 : vector<1x1x128xf32> to vector<1x128xf32>
    %206 = vector.shape_cast %161 : vector<1x128xf32> to vector<1x1x128xf32>
    tpu.vector_store %arg5[%c0_97, %c4_98, %c0_99], %206 {strides = array<i32>} : memref<1x10x128xf32, #tpu.memory_space<vmem>>, vector<1x1x128xf32>,
    %c0_100 = arith.constant 0 : index
    %c5 = arith.constant 5 : index
    %c0_101 = arith.constant 0 : index
    %207 = vector.load %arg4[%c0_100, %c5, %c0_101] : memref<1x10x128xf32, #tpu.memory_space<vmem>>, vector<1x1x128xf32>
    %208 = vector.shape_cast %207 : vector<1x1x128xf32> to vector<1x128xf32>
    %209 = vector.shape_cast %134 : vector<1x128xf32> to vector<1x1x128xf32>
    tpu.vector_store %arg4[%c0_100, %c5, %c0_101], %209 {strides = array<i32>} : memref<1x10x128xf32, #tpu.memory_space<vmem>>, vector<1x1x128xf32>,
    %c0_102 = arith.constant 0 : index
    %c5_103 = arith.constant 5 : index
    %c0_104 = arith.constant 0 : index
    %210 = vector.load %arg5[%c0_102, %c5_103, %c0_104] : memref<1x10x128xf32, #tpu.memory_space<vmem>>, vector<1x1x128xf32>
    %211 = vector.shape_cast %210 : vector<1x1x128xf32> to vector<1x128xf32>
    %212 = vector.shape_cast %164 : vector<1x128xf32> to vector<1x1x128xf32>
    tpu.vector_store %arg5[%c0_102, %c5_103, %c0_104], %212 {strides = array<i32>} : memref<1x10x128xf32, #tpu.memory_space<vmem>>, vector<1x1x128xf32>,
    %c0_105 = arith.constant 0 : index
    %c6 = arith.constant 6 : index
    %c0_106 = arith.constant 0 : index
    %213 = vector.load %arg4[%c0_105, %c6, %c0_106] : memref<1x10x128xf32, #tpu.memory_space<vmem>>, vector<1x1x128xf32>
    %214 = vector.shape_cast %213 : vector<1x1x128xf32> to vector<1x128xf32>
    %215 = vector.shape_cast %137 : vector<1x128xf32> to vector<1x1x128xf32>
    tpu.vector_store %arg4[%c0_105, %c6, %c0_106], %215 {strides = array<i32>} : memref<1x10x128xf32, #tpu.memory_space<vmem>>, vector<1x1x128xf32>,
    %c0_107 = arith.constant 0 : index
    %c6_108 = arith.constant 6 : index
    %c0_109 = arith.constant 0 : index
    %216 = vector.load %arg5[%c0_107, %c6_108, %c0_109] : memref<1x10x128xf32, #tpu.memory_space<vmem>>, vector<1x1x128xf32>
    %217 = vector.shape_cast %216 : vector<1x1x128xf32> to vector<1x128xf32>
    %218 = vector.shape_cast %167 : vector<1x128xf32> to vector<1x1x128xf32>
    tpu.vector_store %arg5[%c0_107, %c6_108, %c0_109], %218 {strides = array<i32>} : memref<1x10x128xf32, #tpu.memory_space<vmem>>, vector<1x1x128xf32>,
    %c0_110 = arith.constant 0 : index
    %c7 = arith.constant 7 : index
    %c0_111 = arith.constant 0 : index
    %219 = vector.load %arg4[%c0_110, %c7, %c0_111] : memref<1x10x128xf32, #tpu.memory_space<vmem>>, vector<1x1x128xf32>
    %220 = vector.shape_cast %219 : vector<1x1x128xf32> to vector<1x128xf32>
    %221 = vector.shape_cast %140 : vector<1x128xf32> to vector<1x1x128xf32>
    tpu.vector_store %arg4[%c0_110, %c7, %c0_111], %221 {strides = array<i32>} : memref<1x10x128xf32, #tpu.memory_space<vmem>>, vector<1x1x128xf32>,
    %c0_112 = arith.constant 0 : index
    %c7_113 = arith.constant 7 : index
    %c0_114 = arith.constant 0 : index
    %222 = vector.load %arg5[%c0_112, %c7_113, %c0_114] : memref<1x10x128xf32, #tpu.memory_space<vmem>>, vector<1x1x128xf32>
    %223 = vector.shape_cast %222 : vector<1x1x128xf32> to vector<1x128xf32>
    %224 = vector.shape_cast %170 : vector<1x128xf32> to vector<1x1x128xf32>
    tpu.vector_store %arg5[%c0_112, %c7_113, %c0_114], %224 {strides = array<i32>} : memref<1x10x128xf32, #tpu.memory_space<vmem>>, vector<1x1x128xf32>,
    %c0_115 = arith.constant 0 : index
    %c8 = arith.constant 8 : index
    %c0_116 = arith.constant 0 : index
    %225 = vector.load %arg4[%c0_115, %c8, %c0_116] : memref<1x10x128xf32, #tpu.memory_space<vmem>>, vector<1x1x128xf32>
    %226 = vector.shape_cast %225 : vector<1x1x128xf32> to vector<1x128xf32>
    %227 = vector.shape_cast %143 : vector<1x128xf32> to vector<1x1x128xf32>
    tpu.vector_store %arg4[%c0_115, %c8, %c0_116], %227 {strides = array<i32>} : memref<1x10x128xf32, #tpu.memory_space<vmem>>, vector<1x1x128xf32>,
    %c0_117 = arith.constant 0 : index
    %c8_118 = arith.constant 8 : index
    %c0_119 = arith.constant 0 : index
    %228 = vector.load %arg5[%c0_117, %c8_118, %c0_119] : memref<1x10x128xf32, #tpu.memory_space<vmem>>, vector<1x1x128xf32>
    %229 = vector.shape_cast %228 : vector<1x1x128xf32> to vector<1x128xf32>
    %230 = vector.shape_cast %173 : vector<1x128xf32> to vector<1x1x128xf32>
    tpu.vector_store %arg5[%c0_117, %c8_118, %c0_119], %230 {strides = array<i32>} : memref<1x10x128xf32, #tpu.memory_space<vmem>>, vector<1x1x128xf32>,
    %c0_120 = arith.constant 0 : index
    %c9 = arith.constant 9 : index
    %c0_121 = arith.constant 0 : index
    %231 = vector.load %arg4[%c0_120, %c9, %c0_121] : memref<1x10x128xf32, #tpu.memory_space<vmem>>, vector<1x1x128xf32>
    %232 = vector.shape_cast %231 : vector<1x1x128xf32> to vector<1x128xf32>
    %233 = vector.shape_cast %146 : vector<1x128xf32> to vector<1x1x128xf32>
    tpu.vector_store %arg4[%c0_120, %c9, %c0_121], %233 {strides = array<i32>} : memref<1x10x128xf32, #tpu.memory_space<vmem>>, vector<1x1x128xf32>,
    %c0_122 = arith.constant 0 : index
    %c9_123 = arith.constant 9 : index
    %c0_124 = arith.constant 0 : index
    %234 = vector.load %arg5[%c0_122, %c9_123, %c0_124] : memref<1x10x128xf32, #tpu.memory_space<vmem>>, vector<1x1x128xf32>
    %235 = vector.shape_cast %234 : vector<1x1x128xf32> to vector<1x128xf32>
    %236 = vector.shape_cast %176 : vector<1x128xf32> to vector<1x1x128xf32>
    tpu.vector_store %arg5[%c0_122, %c9_123, %c0_124], %236 {strides = array<i32>} : memref<1x10x128xf32, #tpu.memory_space<vmem>>, vector<1x1x128xf32>,
    return
  }
  func.func @transform_0(%arg0: i32) -> (i32, i32) {
    %c0_i32 = arith.constant 0 : i32
    %c0_i32_0 = arith.constant 0 : i32
    return %arg0, %c0_i32 : i32, i32
  }
  func.func @transform_1(%arg0: i32) -> (i32, i32) {
    %c0_i32 = arith.constant 0 : i32
    %c0_i32_0 = arith.constant 0 : i32
    return %arg0, %c0_i32 : i32, i32
  }
  func.func @transform_2(%arg0: i32) -> (i32, i32) {
    %c0_i32 = arith.constant 0 : i32
    %c0_i32_0 = arith.constant 0 : i32
    return %arg0, %c0_i32 : i32, i32
  }
  func.func @transform_3(%arg0: i32) -> (i32, i32, i32) {
    %c0_i32 = arith.constant 0 : i32
    %c0_i32_0 = arith.constant 0 : i32
    %c0_i32_1 = arith.constant 0 : i32
    return %arg0, %c0_i32, %c0_i32_0 : i32, i32, i32
  }
  func.func @transform_4(%arg0: i32) -> (i32, i32, i32) {
    %c0_i32 = arith.constant 0 : i32
    %c0_i32_0 = arith.constant 0 : i32
    %c0_i32_1 = arith.constant 0 : i32
    return %arg0, %c0_i32, %c0_i32_0 : i32, i32, i32
  }
}

</mosaic_0001>

<llo_original>
// kernel: tpu_custom_call.1
$region0: #{tpu_custom_call.1}
  #allocation0 [shape = 'u32[]', space=smem, size = 0x4, offset = 0x4, fixed_abs, tag = 'smem constant byte address 0x4 - core index']
  #allocation1 [shape = 'u32[72,128]{1,0:T(1,128)}', space=vmem, size = 0x9000, scoped, tag = 'internal scratch']
  %s0 = inlined_call_operand.hbm [shape: f32[4,128], index: 0, kind: input, shape index: {}]
  %s1 = inlined_call_operand.hbm [shape: f32[4,128], index: 1, kind: input, shape index: {}]
  %s2 = inlined_call_operand.hbm [shape: f32[4,128], index: 2, kind: input, shape index: {}]
  %s3 = inlined_call_operand.vmem [shape: f32[1,10,128], index: 3, kind: output, shape index: {0}]
  %s4 = inlined_call_operand.vmem [shape: f32[1,10,128], index: 4, kind: output, shape index: {1}]
  %5 = xla_tuple %s3, %s4
  %s6 = sld [smem:[#allocation0]]
  $region42: #{tpu_custom_call.1} parent=0
    _
  %s8 = ssub.s32 1, %s6
  %s9 = scalar_select 0, %s8, %s6
  $region1: #{tpu_custom_call.1} parent=0
    #allocation2 [shape = 'u8[2048]{0}', space=vmem, size = 0x800, scoped, tag = 'input window, operand 0, single buffered']
    #allocation3 [shape = 's32[1]{0}', space=sflag, size = 0x4, scoped, tag = 'scoped memory for tpu_custom_call.1']
    #allocation4 [shape = 'u8[2048]{0}', space=vmem, size = 0x800, scoped, tag = 'input window, operand 1, single buffered']
    #allocation5 [shape = 's32[1]{0}', space=sflag, size = 0x4, scoped, tag = 'scoped memory for tpu_custom_call.1']
    #allocation6 [shape = 'u8[2048]{0}', space=vmem, size = 0x800, scoped, tag = 'input window, operand 2, single buffered']
    %10 = vsyncpa [#allocation3], 0
    %11 = vsyncpa [#allocation5], 0
    // Predicated region
    $region2: #{tpu_custom_call.1} parent=1 // pred_check
      _
    $region3: #{tpu_custom_call.1} parent=1 // pred_check_branch
      %13 = sbr.rel (0) target = $region5
    $region4: #{tpu_custom_call.1} parent=1 // pred_region
      %15 = vsyncadd [#allocation3], 0
      %s17 = sshll.u32 %s0, 4
      %s18 = int_to_ptr.hbm [resolvable:$true] %s17
      %s19 = sshll.u32 [#allocation2], 4
      %s20 = int_to_ptr.vmem [resolvable:$true] %s19
      %22 = dma.hbm_to_vmem [thread:$0]  %s18, 64, %s20, [#allocation3]
    $region5: #{tpu_custom_call.1} parent=1 // pred_fallthru
      _
    // Predicated region
    $region6: #{tpu_custom_call.1} parent=1 // pred_check
      _
    $region7: #{tpu_custom_call.1} parent=1 // pred_check_branch
      %24 = sbr.rel (0) target = $region9
    $region8: #{tpu_custom_call.1} parent=1 // pred_region
      %26 = vsyncadd [#allocation5], 0
      %s28 = sshll.u32 %s1, 4
      %s29 = int_to_ptr.hbm [resolvable:$true] %s28
      %s30 = sshll.u32 [#allocation4], 4
      %s31 = int_to_ptr.vmem [resolvable:$true] %s30
      %33 = dma.hbm_to_vmem [thread:$0]  %s29, 64, %s31, [#allocation5]
    $region9: #{tpu_custom_call.1} parent=1 // pred_fallthru
      _
    // Predicated region
    $region10: #{tpu_custom_call.1} parent=1 // pred_check
      _
    $region11: #{tpu_custom_call.1} parent=1 // pred_check_branch
      %35 = sbr.rel (0) target = $region13
    $region12: #{tpu_custom_call.1} parent=1 // pred_region
      %37 = vsyncadd [#allocation5], 0
      %s39 = sshll.u32 %s2, 4
      %s40 = int_to_ptr.hbm [resolvable:$true] %s39
      %s41 = sshll.u32 [#allocation6], 4
      %s42 = int_to_ptr.vmem [resolvable:$true] %s41
      %44 = dma.hbm_to_vmem [thread:$0]  %s40, 64, %s42, [#allocation5]
    $region13: #{tpu_custom_call.1} parent=1 // pred_fallthru
      _
    // Predicated region
    $region14: #{tpu_custom_call.1} parent=1 // pred_check
      _
    $region15: #{tpu_custom_call.1} parent=1 // pred_check_branch
      %46 = sbr.rel (0) target = $region17
    $region16: #{tpu_custom_call.1} parent=1 // pred_region
      %48 = dma.done [#allocation3], 64
    $region17: #{tpu_custom_call.1} parent=1 // pred_fallthru
      _
    // Predicated region
    $region18: #{tpu_custom_call.1} parent=1 // pred_check
      _
    $region19: #{tpu_custom_call.1} parent=1 // pred_check_branch
      %50 = sbr.rel (0) target = $region21
    $region20: #{tpu_custom_call.1} parent=1 // pred_region
      %52 = dma.done [#allocation5], 64
    $region21: #{tpu_custom_call.1} parent=1 // pred_fallthru
      _
    // Predicated region
    $region22: #{tpu_custom_call.1} parent=1 // pred_check
      _
    $region23: #{tpu_custom_call.1} parent=1 // pred_check_branch
      %54 = sbr.rel (0) target = $region25
    $region24: #{tpu_custom_call.1} parent=1 // pred_region
      %56 = dma.done [#allocation5], 64
    $region25: #{tpu_custom_call.1} parent=1 // pred_fallthru
      _
    %v57 = vld [vmem:[#allocation2] sm:$0xf]
    %v58 = vld [vmem:[#allocation4] sm:$0xf]
    %v59 = vld [vmem:[#allocation6] sm:$0xf]
    %v60 = vand.u32 2147483647, %v57
    %v61 = vsub.f32 0.0, %v60
    %v62 = vmul.f32 %v61, 1.442695
    %v63 = vpow.pop %v62
    %v64 = vadd.f32 %v63, 1.0
    %v65 = vrcp.pop %v64
    %v66 = vmul.f32 %v64, %v65
    %v67 = vsub.f32 2.0, %v66
    %v68 = vmul.f32 %v65, %v67
    %vm69 = vcmp.ge.f32.partialorder %v57, 0.0
    %v70 = vmul.f32 %v63, %v68
    %v71 = vsel %vm69, %v68, %v70
    %v72 = vsub.f32 %v71, %v58
    %v73 = vand.u32 2147483647, %v72
    %v74 = vmax.f32 %v57, 0.0
    %v75 = vmul.f32 %v57, %v58
    %v76 = vsub.f32 %v74, %v75
    %v77 = vadd.f32 %v63, 1.0
    %v78 = vlog2.pop %v77
    %v79 = vmul.f32 %v78, 0.6931472
    %v80 = vmul.f32 -0.5, %v63
    %v81 = vadd.f32 %v80, 1.0
    %v82 = vmul.f32 %v81, %v63
    %v83 = vand.u32 2147483647, %v63
    %vm84 = vcmp.lt.f32.partialorder %v83, 0.0004427343
    %v85 = vsel %vm84, %v82, %v79
    %v86 = vadd.f32 %v76, %v85
    %vm87 = vcmp.gt.f32.partialorder %v59, 0.0
    %v88 = vmul.f32 %v73, 10.0
    %v89 = vfloor.f32 %v88
    %v90 = vmin.f32 %v89, 9.0
    %v91 = vsel %vm87, %v90, -1.0
    %v92 = vsel %vm87, %v86, 0.0
    %vm93 = vcmp.eq.f32.partialorder %v91, 0.0
    %v94 = vsel %vm93, 1, 0
    %v95 = vcvt.s32.f32 %v94
    %v96 = vsel %vm93, %v92, 0.0
    %vm97 = vcmp.eq.f32.partialorder %v91, 1.0
    %v98 = vsel %vm97, 1, 0
    %v99 = vcvt.s32.f32 %v98
    %v100 = vsel %vm97, %v92, 0.0
    %vm101 = vcmp.eq.f32.partialorder %v91, 2.0
    %v102 = vsel %vm101, 1, 0
    %v103 = vcvt.s32.f32 %v102
    %v104 = vsel %vm101, %v92, 0.0
    %vm105 = vcmp.eq.f32.partialorder %v91, 3.0
    %v106 = vsel %vm105, 1, 0
    %v107 = vcvt.s32.f32 %v106
    %v108 = vsel %vm105, %v92, 0.0
    %vm109 = vcmp.eq.f32.partialorder %v91, 4.0
    %v110 = vsel %vm109, 1, 0
    %v111 = vcvt.s32.f32 %v110
    %v112 = vsel %vm109, %v92, 0.0
    %vm113 = vcmp.eq.f32.partialorder %v91, 5.0
    %v114 = vsel %vm113, 1, 0
    %v115 = vcvt.s32.f32 %v114
    %v116 = vsel %vm113, %v92, 0.0
    %vm117 = vcmp.eq.f32.partialorder %v91, 6.0
    %v118 = vsel %vm117, 1, 0
    %v119 = vcvt.s32.f32 %v118
    %v120 = vsel %vm117, %v92, 0.0
    %vm121 = vcmp.eq.f32.partialorder %v91, 7.0
    %v122 = vsel %vm121, 1, 0
    %v123 = vcvt.s32.f32 %v122
    %v124 = vsel %vm121, %v92, 0.0
    %vm125 = vcmp.eq.f32.partialorder %v91, 8.0
    %v126 = vsel %vm125, 1, 0
    %v127 = vcvt.s32.f32 %v126
    %v128 = vsel %vm125, %v92, 0.0
    %vm129 = vcmp.eq.f32.partialorder %v91, 9.0
    %v130 = vsel %vm129, 1, 0
    %v131 = vcvt.s32.f32 %v130
    %v132 = vsel %vm129, %v92, 0.0
    %vm133 = vcmask 1043456
    %v134 = vsel %vm133, %v95, 0.0
    %v135 = vrot.slane %v134, 4
    %v136 = vadd.f32 %v134, %v135
    %v137 = vrot.slane %v136, 2
    %v138 = vadd.f32 %v136, %v137
    %v139 = vrot.slane %v138, 1
    %v140 = vadd.f32 %v138, %v139
    %v141 = vadd.f32 %v140, 0.0
    %v142 = vsel %vm133, %v99, 0.0
    %v143 = vrot.slane %v142, 4
    %v144 = vadd.f32 %v142, %v143
    %v145 = vrot.slane %v144, 2
    %v146 = vadd.f32 %v144, %v145
    %v147 = vrot.slane %v146, 1
    %v148 = vadd.f32 %v146, %v147
    %v149 = vadd.f32 %v148, 0.0
    %v150 = vsel %vm133, %v103, 0.0
    %v151 = vrot.slane %v150, 4
    %v152 = vadd.f32 %v150, %v151
    %v153 = vrot.slane %v152, 2
    %v154 = vadd.f32 %v152, %v153
    %v155 = vrot.slane %v154, 1
    %v156 = vadd.f32 %v154, %v155
    %v157 = vadd.f32 %v156, 0.0
    %v158 = vsel %vm133, %v107, 0.0
    %v159 = vrot.slane %v158, 4
    %v160 = vadd.f32 %v158, %v159
    %v161 = vrot.slane %v160, 2
    %v162 = vadd.f32 %v160, %v161
    %v163 = vrot.slane %v162, 1
    %v164 = vadd.f32 %v162, %v163
    %v165 = vadd.f32 %v164, 0.0
    %v166 = vsel %vm133, %v111, 0.0
    %v167 = vrot.slane %v166, 4
    %v168 = vadd.f32 %v166, %v167
    %v169 = vrot.slane %v168, 2
    %v170 = vadd.f32 %v168, %v169
    %v171 = vrot.slane %v170, 1
    %v172 = vadd.f32 %v170, %v171
    %v173 = vadd.f32 %v172, 0.0
    %v174 = vsel %vm133, %v115, 0.0
    %v175 = vrot.slane %v174, 4
    %v176 = vadd.f32 %v174, %v175
    %v177 = vrot.slane %v176, 2
    %v178 = vadd.f32 %v176, %v177
    %v179 = vrot.slane %v178, 1
    %v180 = vadd.f32 %v178, %v179
    %v181 = vadd.f32 %v180, 0.0
    %v182 = vsel %vm133, %v119, 0.0
    %v183 = vrot.slane %v182, 4
    %v184 = vadd.f32 %v182, %v183
    %v185 = vrot.slane %v184, 2
    %v186 = vadd.f32 %v184, %v185
    %v187 = vrot.slane %v186, 1
    %v188 = vadd.f32 %v186, %v187
    %v189 = vadd.f32 %v188, 0.0
    %v190 = vsel %vm133, %v123, 0.0
    %v191 = vrot.slane %v190, 4
    %v192 = vadd.f32 %v190, %v191
    %v193 = vrot.slane %v192, 2
    %v194 = vadd.f32 %v192, %v193
    %v195 = vrot.slane %v194, 1
    %v196 = vadd.f32 %v194, %v195
    %v197 = vadd.f32 %v196, 0.0
    %v198 = vsel %vm133, %v127, 0.0
    %v199 = vrot.slane %v198, 4
    %v200 = vadd.f32 %v198, %v199
    %v201 = vrot.slane %v200, 2
    %v202 = vadd.f32 %v200, %v201
    %v203 = vrot.slane %v202, 1
    %v204 = vadd.f32 %v202, %v203
    %v205 = vadd.f32 %v204, 0.0
    %v206 = vsel %vm133, %v131, 0.0
    %v207 = vrot.slane %v206, 4
    %v208 = vadd.f32 %v206, %v207
    %v209 = vrot.slane %v208, 2
    %v210 = vadd.f32 %v208, %v209
    %v211 = vrot.slane %v210, 1
    %v212 = vadd.f32 %v210, %v211
    %v213 = vadd.f32 %v212, 0.0
    %v214 = vsel %vm133, %v96, 0.0
    %v215 = vrot.slane %v214, 4
    %v216 = vadd.f32 %v214, %v215
    %v217 = vrot.slane %v216, 2
    %v218 = vadd.f32 %v216, %v217
    %v219 = vrot.slane %v218, 1
    %v220 = vadd.f32 %v218, %v219
    %v221 = vadd.f32 %v220, 0.0
    %v222 = vsel %vm133, %v100, 0.0
    %v223 = vrot.slane %v222, 4
    %v224 = vadd.f32 %v222, %v223
    %v225 = vrot.slane %v224, 2
    %v226 = vadd.f32 %v224, %v225
    %v227 = vrot.slane %v226, 1
    %v228 = vadd.f32 %v226, %v227
    %v229 = vadd.f32 %v228, 0.0
    %v230 = vsel %vm133, %v104, 0.0
    %v231 = vrot.slane %v230, 4
    %v232 = vadd.f32 %v230, %v231
    %v233 = vrot.slane %v232, 2
    %v234 = vadd.f32 %v232, %v233
    %v235 = vrot.slane %v234, 1
    %v236 = vadd.f32 %v234, %v235
    %v237 = vadd.f32 %v236, 0.0
    %v238 = vsel %vm133, %v108, 0.0
    %v239 = vrot.slane %v238, 4
    %v240 = vadd.f32 %v238, %v239
    %v241 = vrot.slane %v240, 2
    %v242 = vadd.f32 %v240, %v241
    %v243 = vrot.slane %v242, 1
    %v244 = vadd.f32 %v242, %v243
    %v245 = vadd.f32 %v244, 0.0
    %v246 = vsel %vm133, %v112, 0.0
    %v247 = vrot.slane %v246, 4
    %v248 = vadd.f32 %v246, %v247
    %v249 = vrot.slane %v248, 2
    %v250 = vadd.f32 %v248, %v249
    %v251 = vrot.slane %v250, 1
    %v252 = vadd.f32 %v250, %v251
    %v253 = vadd.f32 %v252, 0.0
    %v254 = vsel %vm133, %v116, 0.0
    %v255 = vrot.slane %v254, 4
    %v256 = vadd.f32 %v254, %v255
    %v257 = vrot.slane %v256, 2
    %v258 = vadd.f32 %v256, %v257
    %v259 = vrot.slane %v258, 1
    %v260 = vadd.f32 %v258, %v259
    %v261 = vadd.f32 %v260, 0.0
    %v262 = vsel %vm133, %v120, 0.0
    %v263 = vrot.slane %v262, 4
    %v264 = vadd.f32 %v262, %v263
    %v265 = vrot.slane %v264, 2
    %v266 = vadd.f32 %v264, %v265
    %v267 = vrot.slane %v266, 1
    %v268 = vadd.f32 %v266, %v267
    %v269 = vadd.f32 %v268, 0.0
    %v270 = vsel %vm133, %v124, 0.0
    %v271 = vrot.slane %v270, 4
    %v272 = vadd.f32 %v270, %v271
    %v273 = vrot.slane %v272, 2
    %v274 = vadd.f32 %v272, %v273
    %v275 = vrot.slane %v274, 1
    %v276 = vadd.f32 %v274, %v275
    %v277 = vadd.f32 %v276, 0.0
    %v278 = vsel %vm133, %v128, 0.0
    %v279 = vrot.slane %v278, 4
    %v280 = vadd.f32 %v278, %v279
    %v281 = vrot.slane %v280, 2
    %v282 = vadd.f32 %v280, %v281
    %v283 = vrot.slane %v282, 1
    %v284 = vadd.f32 %v282, %v283
    %v285 = vadd.f32 %v284, 0.0
    %v286 = vsel %vm133, %v132, 0.0
    %v287 = vrot.slane %v286, 4
    %v288 = vadd.f32 %v286, %v287
    %v289 = vrot.slane %v288, 2
    %v290 = vadd.f32 %v288, %v289
    %v291 = vrot.slane %v290, 1
    %v292 = vadd.f32 %v290, %v291
    %v293 = vadd.f32 %v292, 0.0
    %294 = vst [vmem:[%s3] sm:$0x1] %v141
    %295 = vst [vmem:[%s4] sm:$0x1] %v221
    %296 = vst [vmem:[%s3 + $0x1] sm:$0x1] %v149
    %297 = vst [vmem:[%s4 + $0x1] sm:$0x1] %v229
    %298 = vst [vmem:[%s3 + $0x2] sm:$0x1] %v157
    %299 = vst [vmem:[%s4 + $0x2] sm:$0x1] %v237
    %300 = vst [vmem:[%s3 + $0x3] sm:$0x1] %v165
    %301 = vst [vmem:[%s4 + $0x3] sm:$0x1] %v245
    %302 = vst [vmem:[%s3 + $0x4] sm:$0x1] %v173
    %303 = vst [vmem:[%s4 + $0x4] sm:$0x1] %v253
    %304 = vst [vmem:[%s3 + $0x5] sm:$0x1] %v181
    %305 = vst [vmem:[%s4 + $0x5] sm:$0x1] %v261
    %306 = vst [vmem:[%s3 + $0x6] sm:$0x1] %v189
    %307 = vst [vmem:[%s4 + $0x6] sm:$0x1] %v269
    %308 = vst [vmem:[%s3 + $0x7] sm:$0x1] %v197
    %309 = vst [vmem:[%s4 + $0x7] sm:$0x1] %v277
    %310 = vst [vmem:[%s3 + $0x8] sm:$0x1] %v205
    %311 = vst [vmem:[%s4 + $0x8] sm:$0x1] %v285
    %312 = vst [vmem:[%s3 + $0x9] sm:$0x1] %v213
    %313 = vst [vmem:[%s4 + $0x9] sm:$0x1] %v293
    // Predicated region
    $region26: #{tpu_custom_call.1} parent=1 // pred_check
      _
    $region27: #{tpu_custom_call.1} parent=1 // pred_check_branch
      %315 = sbr.rel (0) target = $region29
    $region28: #{tpu_custom_call.1} parent=1 // pred_region
      _
    $region29: #{tpu_custom_call.1} parent=1 // pred_fallthru
      _
    // Predicated region
    $region30: #{tpu_custom_call.1} parent=1 // pred_check
      _
    $region31: #{tpu_custom_call.1} parent=1 // pred_check_branch
      %317 = sbr.rel (0) target = $region33
    $region32: #{tpu_custom_call.1} parent=1 // pred_region
      _
    $region33: #{tpu_custom_call.1} parent=1 // pred_fallthru
      _
    // Predicated region
    $region34: #{tpu_custom_call.1} parent=1 // pred_check
      _
    $region35: #{tpu_custom_call.1} parent=1 // pred_check_branch
      %319 = sbr.rel (0) target = $region37
    $region36: #{tpu_custom_call.1} parent=1 // pred_region
      _
    $region37: #{tpu_custom_call.1} parent=1 // pred_fallthru
      _
    // Predicated region
    $region38: #{tpu_custom_call.1} parent=1 // pred_check
      _
    $region39: #{tpu_custom_call.1} parent=1 // pred_check_branch
      %321 = sbr.rel (0) target = $region41
    $region40: #{tpu_custom_call.1} parent=1 // pred_region
      _
    $region41: #{tpu_custom_call.1} parent=1 // pred_fallthru
      _
    %322 = vsyncpa [#allocation3], 1
    %323 = vsyncpa [#allocation5], 1

</llo_original>
